<compile_context>
chip_gen: v6e
topology: v6e:2x2x1
jax: 0.10.0
libtpu: 0.0.40
codegen_flags: <defaults>
</compile_context>

<pallas_src>
import jax
import jax.numpy as jnp
from jax.experimental import pallas as pl
from jax.experimental.pallas import tpu as pltpu

HIDDEN = 20          # hidden_neurons (module default)
NUM_LAYERS = 4       # num_layers     (module default)
OUT_DIM = 5          # S, E, I, R, D heads
# packed slab columns: [W0(1) b0(1)] + (num_layers-1)*[Wk(20) bk(1)] + [W4(20) b4(1)]
SLAB_COLS = 2 + (NUM_LAYERS - 1) * (HIDDEN + 1) + (HIDDEN + 1)   # = 86


def _seirnet_kernel(t_ref, w_ref, o_ref):
    """Fused MLP tile: activations kept as (H, tm), batch on the lane axis."""
    t = t_ref[...]          # (1, tm)   time points, lane-dense
    slab = w_ref[...]       # (HIDDEN, SLAB_COLS)  packed weights + biases

    # Layer 0: Linear(1, H) as an outer-product broadcast on the VPU
    # (skip the K=1 MXU matmul entirely).
    w0 = slab[:, 0:1]       # (H, 1)
    b0 = slab[:, 1:2]       # (H, 1)
    h = jnp.tanh(w0 * t + b0)                       # (H, tm)

    # Hidden layers: Linear(H, H) on the MXU (M=K=H, N=tm lane-dense)
    col = 2
    for _ in range(NUM_LAYERS - 1):
        wk = slab[:, col:col + HIDDEN]              # (H, H)
        bk = slab[:, col + HIDDEN:col + HIDDEN + 1] # (H, 1)
        h = jnp.tanh(jnp.dot(wk, h, preferred_element_type=jnp.float32) + bk)
        col += HIDDEN + 1

    # Output layer: Linear(H, 5) + sigmoid.  sigmoid(x) = 0.5*(tanh(0.5x)+1)
    # keeps it to a single EUP op instead of exp + divide.
    w4 = slab[0:OUT_DIM, col:col + HIDDEN]                  # (5, H)
    b4 = slab[0:OUT_DIM, col + HIDDEN:col + HIDDEN + 1]     # (5, 1)
    logits = jnp.dot(w4, h, preferred_element_type=jnp.float32) + b4  # (5, tm)
    o_ref[...] = (0.5 * (jnp.tanh(0.5 * logits) + 1.0)).astype(o_ref.dtype)


def _pack_params(params):
    """Pack the 5 (W, b) pairs into one (HIDDEN, SLAB_COLS) f32 slab."""
    pieces = []
    for w, b in params:
        out_dim = w.shape[0]
        blk = jnp.concatenate([w, b.reshape(out_dim, 1)], axis=1)  # (out, in+1)
        if out_dim < HIDDEN:
            blk = jnp.pad(blk, ((0, HIDDEN - out_dim), (0, 0)))
        pieces.append(blk.astype(jnp.float32))
    slab = jnp.concatenate(pieces, axis=1)
    assert slab.shape == (HIDDEN, SLAB_COLS)
    return slab


def seirnet_forward(t, params, *, tm=256):
    """Run the fused SEIRNet MLP: sigmoid(net(t)).

    t:      (N, 1) float32 time points (any N; ragged tail is padded here).
    params: list of (W, b) per Linear with W in PyTorch (out, in) layout, b (out,).
    returns (N, 5) float32 in (0, 1).
    """
    N = t.shape[0]
    slab = _pack_params(params)

    # Lane-dense layout: batch on the lane axis, padded to a multiple of tm.
    n_pad = (-N) % tm
    t_lane = jnp.pad(t.reshape(1, N), ((0, 0), (0, n_pad)))
    Np = N + n_pad
    grid = (Np // tm,)

    cost = pl.CostEstimate(
        flops=2 * Np * (HIDDEN + (NUM_LAYERS - 1) * HIDDEN * HIDDEN
                        + HIDDEN * OUT_DIM),
        transcendentals=Np * (NUM_LAYERS * HIDDEN + OUT_DIM),
        bytes_accessed=Np * 4 * (1 + OUT_DIM) + HIDDEN * SLAB_COLS * 4,
    )

    out = pl.pallas_call(
        _seirnet_kernel,
        out_shape=jax.ShapeDtypeStruct((OUT_DIM, Np), jnp.float32),
        grid_spec=pltpu.PrefetchScalarGridSpec(
            num_scalar_prefetch=0,
            grid=grid,
            in_specs=[
                pl.BlockSpec((1, tm), lambda i: (0, i)),                 # t
                pl.BlockSpec((HIDDEN, SLAB_COLS), lambda i: (0, 0)),     # weights
            ],
            out_specs=pl.BlockSpec((OUT_DIM, tm), lambda i: (0, i)),
        ),
        compiler_params=pltpu.CompilerParams(
            dimension_semantics=("parallel",)),
        cost_estimate=cost,
    )(t_lane, slab)

    return out[:, :N].T   # (N, 5)


def init_seirnet_params(key, hidden=HIDDEN, num_layers=NUM_LAYERS, out_dim=OUT_DIM):
    """Xavier-uniform init (gain for tanh = 5/3), bias = 0.01, PyTorch (out, in) layout.

    # TODO(synk): uses JAX's PRNG, so weights are NOT bit-identical to
    # torch.manual_seed(retrain_seed) + xavier_uniform_; load real checkpoint
    # weights to reproduce the PyTorch model exactly.
    """
    gain = 5.0 / 3.0  # nn.init.calculate_gain('tanh')
    dims = [1] + [hidden] * num_layers + [out_dim]
    params = []
    for fan_in, fan_out in zip(dims[:-1], dims[1:]):
        key, sub = jax.random.split(key)
        bound = gain * jnp.sqrt(6.0 / (fan_in + fan_out))
        w = jax.random.uniform(sub, (fan_out, fan_in), jnp.float32,
                               minval=-bound, maxval=bound)
        b = jnp.full((fan_out,), 0.01, jnp.float32)
        params.append((w, b))
    return params


def seirnet_reference(t, params):
    """Plain-JAX reference of the same forward pass (for a sanity check)."""
    h = t
    for w, b in params[:-1]:
        h = jnp.tanh(h @ w.T + b)
    w, b = params[-1]
    return jax.nn.sigmoid(h @ w.T + b)


if __name__ == "__main__":
    key = jax.random.PRNGKey(0)
    pkey, tkey = jax.random.split(key)

    params = init_seirnet_params(pkey)

    # Collocation time points t in [0, 1], shape (N, 1) like the PINN input.
    # N=512 with tm=256 -> grid of 2 'parallel' steps (both v7x TCs busy).
    N = 512
    t = jax.random.uniform(tkey, (N, 1), jnp.float32)

    out = seirnet_forward(t, params, tm=256)
    out = jax.block_until_ready(out)

    ref = seirnet_reference(t, params)
    assert out.shape == (N, OUT_DIM)
    err = float(jnp.max(jnp.abs(out - ref)))
    assert err < 1e-5, f"max abs err {err}"

    # Inverse-mode scalar parameters (beta/gamma/delta properties): plain JAX
    # glue -- scalars outside the network forward hot path.
    beta = jax.nn.sigmoid(jnp.float32(0.3))
    gamma = jax.nn.sigmoid(jnp.float32(0.1))
    delta = jax.nn.sigmoid(jnp.float32(0.05))
    _ = jax.block_until_ready((beta, gamma, delta))

    print("KERNEL_OK")
</pallas_src>

<mosaic_0001>
module attributes {stable_mosaic.version = 11 : i64} {
  func.func @_seirnet_kernel(%arg0: i32, %arg1: memref<1x256xf32, #tpu.memory_space<vmem>>, %arg2: memref<20x86xf32, #tpu.memory_space<vmem>>, %arg3: memref<5x256xf32, #tpu.memory_space<vmem>>) attributes {dimension_semantics = [#tpu.dimension_semantics<parallel>], iteration_bounds = array<i64: 2>, scalar_prefetch = 0 : i64, scratch_operands = 0 : i64, tpu.core_type = #tpu.core_type<tc>, window_params = [{transform_indices = @transform_0, window_bounds = array<i64: 1, 256>}, {pipeline_mode = #tpu.pipeline_mode<synchronous>, transform_indices = @transform_1, window_bounds = array<i64: 20, 86>}, {transform_indices = @transform_2, window_bounds = array<i64: 5, 256>}]} {
    %c0 = arith.constant 0 : index
    %c0_0 = arith.constant 0 : index
    %0 = vector.load %arg1[%c0, %c0_0] : memref<1x256xf32, #tpu.memory_space<vmem>>, vector<1x256xf32>
    %c0_1 = arith.constant 0 : index
    %c0_2 = arith.constant 0 : index
    %1 = vector.load %arg2[%c0_1, %c0_2] : memref<20x86xf32, #tpu.memory_space<vmem>>, vector<20x86xf32>
    %2 = vector.extract_strided_slice %1 {offsets = [0, 0], sizes = [20, 1], strides = [1, 1]} : vector<20x86xf32> to vector<20x1xf32>
    %3 = vector.extract_strided_slice %1 {offsets = [0, 1], sizes = [20, 1], strides = [1, 1]} : vector<20x86xf32> to vector<20x1xf32>
    %4 = vector.broadcast %2 : vector<20x1xf32> to vector<20x256xf32>
    %5 = vector.broadcast %0 : vector<1x256xf32> to vector<20x256xf32>
    %6 = arith.mulf %4, %5 : vector<20x256xf32>
    %7 = vector.broadcast %3 : vector<20x1xf32> to vector<20x256xf32>
    %8 = arith.addf %6, %7 : vector<20x256xf32>
    %9 = math.tanh %8 : vector<20x256xf32>
    %10 = vector.extract_strided_slice %1 {offsets = [0, 2], sizes = [20, 20], strides = [1, 1]} : vector<20x86xf32> to vector<20x20xf32>
    %11 = vector.extract_strided_slice %1 {offsets = [0, 22], sizes = [20, 1], strides = [1, 1]} : vector<20x86xf32> to vector<20x1xf32>
    %cst = arith.constant dense<0.000000e+00> : vector<20x256xf32>
    %12 = tpu.matmul %10, %9, %cst {dimension_numbers = #tpu.dot_dimension_numbers<[1], [0], [0], [1], [0, 0, 1, 1], [], []>} : vector<20x20xf32>, vector<20x256xf32>, vector<20x256xf32> -> vector<20x256xf32>
    %13 = vector.broadcast %11 : vector<20x1xf32> to vector<20x256xf32>
    %14 = arith.addf %12, %13 : vector<20x256xf32>
    %15 = math.tanh %14 : vector<20x256xf32>
    %16 = vector.extract_strided_slice %1 {offsets = [0, 23], sizes = [20, 20], strides = [1, 1]} : vector<20x86xf32> to vector<20x20xf32>
    %17 = vector.extract_strided_slice %1 {offsets = [0, 43], sizes = [20, 1], strides = [1, 1]} : vector<20x86xf32> to vector<20x1xf32>
    %cst_3 = arith.constant dense<0.000000e+00> : vector<20x256xf32>
    %18 = tpu.matmul %16, %15, %cst_3 {dimension_numbers = #tpu.dot_dimension_numbers<[1], [0], [0], [1], [0, 0, 1, 1], [], []>} : vector<20x20xf32>, vector<20x256xf32>, vector<20x256xf32> -> vector<20x256xf32>
    %19 = vector.broadcast %17 : vector<20x1xf32> to vector<20x256xf32>
    %20 = arith.addf %18, %19 : vector<20x256xf32>
    %21 = math.tanh %20 : vector<20x256xf32>
    %22 = vector.extract_strided_slice %1 {offsets = [0, 44], sizes = [20, 20], strides = [1, 1]} : vector<20x86xf32> to vector<20x20xf32>
    %23 = vector.extract_strided_slice %1 {offsets = [0, 64], sizes = [20, 1], strides = [1, 1]} : vector<20x86xf32> to vector<20x1xf32>
    %cst_4 = arith.constant dense<0.000000e+00> : vector<20x256xf32>
    %24 = tpu.matmul %22, %21, %cst_4 {dimension_numbers = #tpu.dot_dimension_numbers<[1], [0], [0], [1], [0, 0, 1, 1], [], []>} : vector<20x20xf32>, vector<20x256xf32>, vector<20x256xf32> -> vector<20x256xf32>
    %25 = vector.broadcast %23 : vector<20x1xf32> to vector<20x256xf32>
    %26 = arith.addf %24, %25 : vector<20x256xf32>
    %27 = math.tanh %26 : vector<20x256xf32>
    %28 = vector.extract_strided_slice %1 {offsets = [0, 65], sizes = [5, 20], strides = [1, 1]} : vector<20x86xf32> to vector<5x20xf32>
    %29 = vector.extract_strided_slice %1 {offsets = [0, 85], sizes = [5, 1], strides = [1, 1]} : vector<20x86xf32> to vector<5x1xf32>
    %cst_5 = arith.constant dense<0.000000e+00> : vector<5x256xf32>
    %30 = tpu.matmul %28, %27, %cst_5 {dimension_numbers = #tpu.dot_dimension_numbers<[1], [0], [0], [1], [0, 0, 1, 1], [], []>} : vector<5x20xf32>, vector<20x256xf32>, vector<5x256xf32> -> vector<5x256xf32>
    %31 = vector.broadcast %29 : vector<5x1xf32> to vector<5x256xf32>
    %32 = arith.addf %30, %31 : vector<5x256xf32>
    %cst_6 = arith.constant 5.000000e-01 : f32
    %33 = vector.broadcast %cst_6 : f32 to vector<5x256xf32>
    %34 = arith.mulf %33, %32 : vector<5x256xf32>
    %35 = math.tanh %34 : vector<5x256xf32>
    %cst_7 = arith.constant 1.000000e+00 : f32
    %36 = vector.broadcast %cst_7 : f32 to vector<5x256xf32>
    %37 = arith.addf %35, %36 : vector<5x256xf32>
    %cst_8 = arith.constant 5.000000e-01 : f32
    %38 = vector.broadcast %cst_8 : f32 to vector<5x256xf32>
    %39 = arith.mulf %38, %37 : vector<5x256xf32>
    %c0_9 = arith.constant 0 : index
    %c0_10 = arith.constant 0 : index
    %40 = vector.load %arg3[%c0_9, %c0_10] : memref<5x256xf32, #tpu.memory_space<vmem>>, vector<5x256xf32>
    tpu.vector_store %arg3[%c0_9, %c0_10], %39 {strides = array<i32>} : memref<5x256xf32, #tpu.memory_space<vmem>>, vector<5x256xf32>,
    return
  }
  func.func @transform_0(%arg0: i32) -> (i32, i32) {
    %c0_i32 = arith.constant 0 : i32
    %c0_i32_0 = arith.constant 0 : i32
    return %c0_i32, %arg0 : i32, i32
  }
  func.func @transform_1(%arg0: i32) -> (i32, i32) {
    %c0_i32 = arith.constant 0 : i32
    %c0_i32_0 = arith.constant 0 : i32
    %c0_i32_1 = arith.constant 0 : i32
    return %c0_i32, %c0_i32_0 : i32, i32
  }
  func.func @transform_2(%arg0: i32) -> (i32, i32) {
    %c0_i32 = arith.constant 0 : i32
    %c0_i32_0 = arith.constant 0 : i32
    return %c0_i32, %arg0 : i32, i32
  }
}

</mosaic_0001>

<llo_original>
// kernel: tpu_custom_call.1
$region0: #{tpu_custom_call.1}
  #allocation0 [shape = 'u32[]', space=smem, size = 0x4, offset = 0x4, fixed_abs, tag = 'smem constant byte address 0x4 - core index']
  #allocation1 [shape = 'u32[144,128]{1,0:T(1,128)}', space=vmem, size = 0x12000, scoped, tag = 'internal scratch']
  %s0 = inlined_call_operand.hbm [shape: f32[1,512], index: 0, kind: input, shape index: {}]
  %s1 = inlined_call_operand.hbm [shape: f32[20,86], index: 1, kind: input, shape index: {}]
  %s2 = inlined_call_operand.hbm [shape: f32[5,512], index: 2, kind: output, shape index: {}]
  %s3 = sld [smem:[#allocation0]]
  $region49: #{tpu_custom_call.1} parent=0
    _
  %s5 = ssub.s32 1, %s3
  %s6 = scalar_select 0, %s5, %s3
  $region1: #{tpu_custom_call.1} parent=0
    #allocation2 [shape = 'u8[2048]{0}', space=vmem, size = 0x800, scoped, tag = 'input window, operand 0']
    #allocation3 [shape = 's32[2]{0}', space=sflag, size = 0x8, scoped, tag = 'scoped memory for tpu_custom_call.1']
    #allocation4 [shape = 's32[2]{0}', space=sflag, size = 0x8, scoped, tag = 'scoped memory for tpu_custom_call.1']
    #allocation5 [shape = 'u8[12288]{0}', space=vmem, size = 0x3000, scoped, tag = 'input window, operand 1, single buffered']
    #allocation6 [shape = 's32[1]{0}', space=sflag, size = 0x4, scoped, tag = 'scoped memory for tpu_custom_call.1']
    #allocation7 [shape = 'u8[16384]{0}', space=vmem, size = 0x4000, scoped, tag = 'output window, operand 0']
    %7 = vsyncpa [#allocation3], 0
    %s8 = scalar_lea.sflag [#allocation3], 1
    %9 = vsyncpa %s8, 0
    %10 = vsyncpa [#allocation6], 0
    %11 = vsyncpa [#allocation4], 0
    %s12 = scalar_lea.sflag [#allocation4], 1
    %13 = vsyncpa %s12, 0
    loop: start=0, step=1, limit=4
    $region2: #{tpu_custom_call.1} parent=1 // loop_pre_header
      _
    $region3: #{tpu_custom_call.1} parent=1 // loop_header
      %s15 = sphi 0, %s19
      %p16 = scmp.ge.s32.totalorder %s15, 4
      %s25 = sphi 0, %s27
      %s28 = sphi 0, %s25
      %s29 = sphi 0, %s28
      %s45 = sphi 0, %s29
      %s49 = sphi 0, %s49
      %s51 = sphi 0, %s49
      %s52 = sphi 0, %s51
      %s66 = sphi 0, %s52
      %s72 = sphi 0, %s74
      %s75 = sphi 0, %s72
      %s76 = sphi 0, %s75
      %s92 = sphi 0, %s76
    $region4: #{tpu_custom_call.1} parent=1 // loop_header_branch
      %18 = sbr.rel (%p16) target = $region8
    $region5: #{tpu_custom_call.1} parent=1 // loop_body
      %s20 = ssub.s32 %s15, 1
      %s21 = ssub.s32 %s15, 2
      %s22 = sadd.s32 %s15, 1
      %s23 = ssub.s32 %s15, %s22
      %p24 = scmp.eq.s32.totalorder %s23, 0
      %s26 = sadd.s32 %s25, 1
      %s27 = scalar_select %p24, %s25, %s26
      %p30 = pneg %p24
      %p31 = scmp.eq.s32.totalorder %s15, 1
      %p32 = por %p30, %p31
      %p33 = scmp.ne.s32.totalorder %s25, %s28
      %p34 = scmp.eq.s32.totalorder %s15, 0
      %p35 = por %p33, %p34
      %p36 = scmp.ne.s32.totalorder %s25, %s28
      %p37 = scmp.eq.s32.totalorder %s20, 1
      %p38 = por %p36, %p37
      %p39 = scmp.ne.s32.totalorder %s28, %s29
      %p40 = scmp.eq.s32.totalorder %s20, 0
      %p41 = por %p39, %p40
      %p42 = scmp.ne.s32.totalorder %s28, %s29
      %p43 = scmp.eq.s32.totalorder %s21, 1
      %p44 = por %p42, %p43
      %p46 = scmp.ne.s32.totalorder %s29, %s45
      %p47 = scmp.eq.s32.totalorder %s21, 0
      %p48 = por %p46, %p47
      %s50 = sadd.s32 %s49, 1
      %p53 = scmp.eq.s32.totalorder %s15, 1
      %p54 = scmp.ne.s32.totalorder %s49, %s51
      %p55 = scmp.eq.s32.totalorder %s15, 0
      %p56 = por %p54, %p55
      %p57 = scmp.ne.s32.totalorder %s49, %s51
      %p58 = scmp.eq.s32.totalorder %s20, 1
      %p59 = por %p57, %p58
      %p60 = scmp.ne.s32.totalorder %s51, %s52
      %p61 = scmp.eq.s32.totalorder %s20, 0
      %p62 = por %p60, %p61
      %p63 = scmp.ne.s32.totalorder %s51, %s52
      %p64 = scmp.eq.s32.totalorder %s21, 1
      %p65 = por %p63, %p64
      %p67 = scmp.ne.s32.totalorder %s52, %s66
      %p68 = scmp.eq.s32.totalorder %s21, 0
      %p69 = por %p67, %p68
      %s70 = ssub.s32 %s15, %s22
      %p71 = scmp.eq.s32.totalorder %s70, 0
      %s73 = sadd.s32 %s72, 1
      %s74 = scalar_select %p71, %s72, %s73
      %p77 = pneg %p71
      %p78 = scmp.eq.s32.totalorder %s15, 1
      %p79 = por %p77, %p78
      %p80 = scmp.ne.s32.totalorder %s72, %s75
      %p81 = scmp.eq.s32.totalorder %s15, 0
      %p82 = por %p80, %p81
      %p83 = scmp.ne.s32.totalorder %s72, %s75
      %p84 = scmp.eq.s32.totalorder %s20, 1
      %p85 = por %p83, %p84
      %p86 = scmp.ne.s32.totalorder %s75, %s76
      %p87 = scmp.eq.s32.totalorder %s20, 0
      %p88 = por %p86, %p87
      %p89 = scmp.ne.s32.totalorder %s75, %s76
      %p90 = scmp.eq.s32.totalorder %s21, 1
      %p91 = por %p89, %p90
      %p93 = scmp.ne.s32.totalorder %s76, %s92
      %p94 = scmp.eq.s32.totalorder %s21, 0
      %p95 = por %p93, %p94
      %p96 = scmp.le.s32.totalorder 1, %s15
      %p97 = scmp.lt.s32.totalorder %s15, 3
      %p98 = pnand %p96, %p97
      %p99 = pneg %p98
      // Predicated region
      $region9: #{tpu_custom_call.1} parent=5 // pred_check
        _
      $region10: #{tpu_custom_call.1} parent=5 // pred_check_branch
        %101 = sbr.rel (%p98) target = $region12
      $region11: #{tpu_custom_call.1} parent=5 // pred_region
        %s102 = ssub.s32 %s15, 1
        // Predicated region
        $region13: #{tpu_custom_call.1} parent=11 // pred_check
          %p103 = pneg %p62
        $region14: #{tpu_custom_call.1} parent=11 // pred_check_branch
          %105 = sbr.rel (%p103) target = $region16
        $region15: #{tpu_custom_call.1} parent=11 // pred_region
          %s107 = ssub.s32 384, 384
          %108 = vsyncadd [#allocation6], %s107
          %s109 = sshll.u32 [#allocation5], 4
          %s110 = int_to_ptr.vmem [resolvable:$true] %s109
          %115 = dma.hbm_to_vmem [thread:$0]  %s1, 384, %s110, [#allocation6], 128, 128, 8
        $region16: #{tpu_custom_call.1} parent=11 // pred_fallthru
          _
      $region12: #{tpu_custom_call.1} parent=5 // pred_fallthru
        _
      %p116 = scmp.lt.s32.totalorder %s15, 2
      // Predicated region
      $region17: #{tpu_custom_call.1} parent=5 // pred_check
        %p117 = pneg %p116
      $region18: #{tpu_custom_call.1} parent=5 // pred_check_branch
        %119 = sbr.rel (%p117) target = $region20
      $region19: #{tpu_custom_call.1} parent=5 // pred_region
        // Predicated region
        $region21: #{tpu_custom_call.1} parent=19 // pred_check
          %p120 = pneg %p35
        $region22: #{tpu_custom_call.1} parent=19 // pred_check_branch
          %122 = sbr.rel (%p120) target = $region24
        $region23: #{tpu_custom_call.1} parent=19 // pred_region
          %s123 = sand.u32 %s25, 1
          %s124 = scalar_lea.sflag [#allocation3], %s123
          %s125 = sand.u32 %s25, 1
          %s126 = smul.addr %s125, 2
          %s127 = scalar_lea.vmem [#allocation2], %s126
          %s128 = smul.u32 2, %s15
          %s130 = ssub.s32 32, 32
          %131 = vsyncadd %s124, %s130
          %s132 = smul.addr %s128, 16
          %s133 = scalar_lea.hbm %s0, %s132
          %s135 = sshll.u32 %s127, 4
          %s136 = int_to_ptr.vmem [resolvable:$true] %s135
          %138 = dma.hbm_to_vmem [thread:$0]  %s133, 32, %s136, %s124
        $region24: #{tpu_custom_call.1} parent=19 // pred_fallthru
          _
      $region20: #{tpu_custom_call.1} parent=5 // pred_fallthru
        _
      %p139 = scmp.le.s32.totalorder 1, %s15
      %p140 = scmp.lt.s32.totalorder %s15, 3
      %p141 = pnand %p139, %p140
      %p142 = pneg %p141
      // Predicated region
      $region25: #{tpu_custom_call.1} parent=5 // pred_check
        _
      $region26: #{tpu_custom_call.1} parent=5 // pred_check_branch
        %144 = sbr.rel (%p141) target = $region28
      $region27: #{tpu_custom_call.1} parent=5 // pred_region
        %s145 = ssub.s32 %s15, 1
        %s146 = sand.u32 %s28, 1
        %s147 = scalar_lea.sflag [#allocation3], %s146
        %s148 = sand.u32 %s28, 1
        %s149 = smul.addr %s148, 2
        %s150 = scalar_lea.vmem [#allocation2], %s149
        // Predicated region
        $region29: #{tpu_custom_call.1} parent=27 // pred_check
          %p151 = pneg %p41
        $region30: #{tpu_custom_call.1} parent=27 // pred_check_branch
          %153 = sbr.rel (%p151) target = $region32
        $region31: #{tpu_custom_call.1} parent=27 // pred_region
          %154 = dma.done %s147, 32
        $region32: #{tpu_custom_call.1} parent=27 // pred_fallthru
          _
        // Predicated region
        $region33: #{tpu_custom_call.1} parent=27 // pred_check
          %p155 = pneg %p62
        $region34: #{tpu_custom_call.1} parent=27 // pred_check_branch
          %157 = sbr.rel (%p155) target = $region36
        $region35: #{tpu_custom_call.1} parent=27 // pred_region
          %158 = dma.done [#allocation6], 384
        $region36: #{tpu_custom_call.1} parent=27 // pred_fallthru
          _
        %s159 = sand.u32 %s28, 1
        %s160 = scalar_lea.sflag [#allocation3], %s159
        %s161 = sand.u32 %s28, 1
        %s162 = smul.addr %s161, 2
        %s163 = scalar_lea.vmem [#allocation2], %s162
        %p164 = pneg %p41
        %p165 = pneg %p38
        %p166 = pneg %p62
        %p167 = pneg %p59
        %p168 = pneg %p88
        %p169 = pneg %p85
        %s170 = sand.u32 %s75, 1
        %s171 = scalar_lea.sflag [#allocation4], %s170
        %s172 = sand.u32 %s75, 1
        %s173 = smul.addr %s172, 16
        %s174 = scalar_lea.vmem [#allocation7], %s173
        %s175 = smul.u32 2, %s20
        %s176 = smul.u32 2, %s20
        %v177 = vld [vmem:[%s150] sm:$0x3]
        %v178 = vld [vmem:[#allocation5] sm:$0xff]
        %v179 = vld [vmem:[#allocation5 + $0x8] sm:$0xff]
        %v180 = vld [vmem:[#allocation5 + $0x10] sm:$0xf]
        %182 = vset.pattern.permute.xlu0 0
        %183 = vperm.xlu0 %182, %v178
        %v184 = vpop.permute.xlu0 %183
        %187 = vset.pattern.permute.xlu0 0
        %188 = vperm.xlu0 %187, %v179
        %v189 = vpop.permute.xlu0 %188
        %192 = vset.pattern.permute.xlu0 0
        %193 = vperm.xlu0 %192, %v180
        %v194 = vpop.permute.xlu0 %193
        %v197 = vlaneseq
        %v198 = vshrl.u32 %v197, 7
        %v199 = vsub.s32 0, %v198
        %v200 = vrot.slane %v177, %v199
        %v201 = vlaneseq
        %v202 = vshrl.u32 %v201, 7
        %v203 = vsub.s32 1, %v202
        %v204 = vrot.slane %v177, %v203
        %v207 = vmul.f32 %v184, %v200
        %v208 = vmul.f32 %v184, %v204
        %v209 = vmul.f32 %v189, %v200
        %v210 = vmul.f32 %v189, %v204
        %v211 = vmul.f32 %v194, %v200
        %v212 = vmul.f32 %v194, %v204
        %213 = vset.pattern.permute.xlu0 1
        %214 = vperm.xlu0 %213, %v178
        %v215 = vpop.permute.xlu0 %214
        %217 = vset.pattern.permute.xlu0 1
        %218 = vperm.xlu0 %217, %v179
        %v219 = vpop.permute.xlu0 %218
        %221 = vset.pattern.permute.xlu0 1
        %222 = vperm.xlu0 %221, %v180
        %v223 = vpop.permute.xlu0 %222
        %v225 = vadd.f32 %v207, %v215
        %v226 = vadd.f32 %v208, %v215
        %v227 = vadd.f32 %v209, %v219
        %v228 = vadd.f32 %v210, %v219
        %v229 = vadd.f32 %v211, %v223
        %v230 = vadd.f32 %v212, %v223
        %v231 = vtanh.pop %v225
        %v232 = vtanh.pop %v226
        %v233 = vtanh.pop %v227
        %v234 = vtanh.pop %v228
        %v235 = vtanh.pop %v229
        %v236 = vtanh.pop %v230
        %237 = vset.pattern.permute.xlu0 22
        %238 = vperm.xlu0 %237, %v178
        %v239 = vpop.permute.xlu0 %238
        %241 = vset.pattern.permute.xlu0 22
        %242 = vperm.xlu0 %241, %v179
        %v243 = vpop.permute.xlu0 %242
        %245 = vset.pattern.permute.xlu0 22
        %246 = vperm.xlu0 %245, %v180
        %v247 = vpop.permute.xlu0 %246
        %249 = vrot.lane.b32.xlu0 %v178, 126
        %v250 = vpop.permute.xlu0 %249
        %251 = vrot.lane.b32.xlu0 %v179, 126
        %v252 = vpop.permute.xlu0 %251
        %253 = vrot.lane.b32.xlu0 %v180, 126
        %v254 = vpop.permute.xlu0 %253
        %vm255 = vcmask 162816
        %v256 = vsel %vm255, %v250, 0
        %v258 = vsel %vm255, %v252, 0
        %v260 = vsel %vm255, %v254, 0
        %vm262 = vcmask 1043456
        %v264 = vsel %vm262, %v235, 0
        %v267 = vsel %vm262, %v236, 0
        %269 = vmatprep.subr.mxu0 0.0
        %270 = vmatpush1.msra.mxu0 0.0
        %271 = vmatprep.subr.mxu0 0.0
        %272 = vmatpush1.msra.mxu0 0.0
        %273 = vmatprep.subr.mxu0 0.0
        %274 = vmatpush1.msra.mxu0 0.0
        %275 = vmatprep.subr.mxu0 0.0
        %276 = vmatpush1.msra.mxu0 0.0
        %277 = vmatprep.subr.mxu0 0.0
        %278 = vmatpush1.msra.mxu0 0.0
        %279 = vmatprep.subr.mxu0 0.0
        %280 = vmatpush1.msra.mxu0 0.0
        %281 = vmatprep.subr.mxu0 0.0
        %282 = vmatpush1.msra.mxu0 0.0
        %283 = vmatprep.subr.mxu0 0.0
        %284 = vmatpush1.msra.mxu0 0.0
        %285 = vmatprep.subr.mxu0 0.0
        %286 = vmatpush1.msra.mxu0 0.0
        %287 = vmatprep.subr.mxu0 0.0
        %288 = vmatpush1.msra.mxu0 0.0
        %289 = vmatprep.subr.mxu0 0.0
        %290 = vmatpush1.msra.mxu0 0.0
        %291 = vmatprep.subr.mxu0 0.0
        %292 = vmatpush1.msra.mxu0 0.0
        %293 = vmatprep.subr.mxu0 0.0
        %294 = vmatpush1.msra.mxu0 0.0
        %295 = vmatprep.subr.mxu0 %v267
        %296 = vmatpush1.msra.mxu0 %v264
        %297 = vmatprep.subr.mxu0 %v234
        %298 = vmatpush1.msra.mxu0 %v233
        %299 = vmatprep.subr.mxu0 %v232
        %300 = vmatpush1.msra.mxu0 %v231
        %301 = vmatprep.subr.mxu0 0.0
        %302 = vmatpush2.msra.mxu0 0.0
        %303 = vmatprep.subr.mxu0 0.0
        %304 = vmatpush2.msra.mxu0 0.0
        %305 = vmatprep.subr.mxu0 0.0
        %306 = vmatpush2.msra.mxu0 0.0
        %307 = vmatprep.subr.mxu0 0.0
        %308 = vmatpush2.msra.mxu0 0.0
        %309 = vmatprep.subr.mxu0 0.0
        %310 = vmatpush2.msra.mxu0 0.0
        %311 = vmatprep.subr.mxu0 0.0
        %312 = vmatpush2.msra.mxu0 0.0
        %313 = vmatprep.subr.mxu0 0.0
        %314 = vmatpush2.msra.mxu0 0.0
        %315 = vmatprep.subr.mxu0 0.0
        %316 = vmatpush2.msra.mxu0 0.0
        %317 = vmatprep.subr.mxu0 0.0
        %318 = vmatpush2.msra.mxu0 0.0
        %319 = vmatprep.subr.mxu0 0.0
        %320 = vmatpush2.msra.mxu0 0.0
        %321 = vmatprep.subr.mxu0 0.0
        %322 = vmatpush2.msra.mxu0 0.0
        %323 = vmatprep.subr.mxu0 0.0
        %324 = vmatpush2.msra.mxu0 0.0
        %325 = vmatprep.subr.mxu0 0.0
        %326 = vmatpush2.msra.mxu0 0.0
        %327 = vmatprep.subr.mxu0 0.0
        %328 = vmatpush2.msra.mxu0 0.0
        %329 = vmatprep.subr.mxu0 0.0
        %330 = vmatpush2.msra.mxu0 0.0
        %331 = vmatprep.subr.mxu0 0.0
        %332 = vmatpush2.msra.mxu0 0.0
        %333 = vmatprep.mubr.f32.mxu0 0.0
        %334 = vmatmul.mubr.f32.gmra.mxu0 %v256
        %v335 = vpop.f32.mrf.mxu0
        %v336 = vadd.f32 %v239, %v335
        %v337 = vpop.f32.mrf.mxu0
        %v338 = vadd.f32 %v239, %v337
        %339 = vmatprep.mubr.f32.mxu0 0.0
        %340 = vmatmul.mubr.f32.gmra.mxu0 %v258
        %v341 = vpop.f32.mrf.mxu0
        %v342 = vadd.f32 %v243, %v341
        %v343 = vpop.f32.mrf.mxu0
        %v344 = vadd.f32 %v243, %v343
        %345 = vmatprep.mubr.f32.mxu0 0.0
        %346 = vmatmul.mubr.f32.gmra.mxu0 %v260
        %v347 = vpop.f32.mrf.mxu0
        %v348 = vadd.f32 %v247, %v347
        %v349 = vpop.f32.mrf.mxu0
        %v350 = vadd.f32 %v247, %v349
        %351 = vdwg.mxu0
        %v352 = vtanh.pop %v336
        %v353 = vtanh.pop %v338
        %v354 = vtanh.pop %v342
        %v355 = vtanh.pop %v344
        %v356 = vtanh.pop %v348
        %v357 = vtanh.pop %v350
        %358 = vset.pattern.permute.xlu0 43
        %359 = vperm.xlu0 %358, %v178
        %v360 = vpop.permute.xlu0 %359
        %362 = vset.pattern.permute.xlu0 43
        %363 = vperm.xlu0 %362, %v179
        %v364 = vpop.permute.xlu0 %363
        %366 = vset.pattern.permute.xlu0 43
        %367 = vperm.xlu0 %366, %v180
        %v368 = vpop.permute.xlu0 %367
        %370 = vrot.lane.b32.xlu0 %v178, 105
        %v371 = vpop.permute.xlu0 %370
        %372 = vrot.lane.b32.xlu0 %v179, 105
        %v373 = vpop.permute.xlu0 %372
        %374 = vrot.lane.b32.xlu0 %v180, 105
        %v375 = vpop.permute.xlu0 %374
        %v376 = vsel %vm255, %v371, 0
        %v378 = vsel %vm255, %v373, 0
        %v380 = vsel %vm255, %v375, 0
        %v383 = vsel %vm262, %v356, 0
        %v386 = vsel %vm262, %v357, 0
        %388 = vmatprep.subr.mxu0 0.0
        %389 = vmatpush1.msra.mxu0 0.0
        %390 = vmatprep.subr.mxu0 0.0
        %391 = vmatpush1.msra.mxu0 0.0
        %392 = vmatprep.subr.mxu0 0.0
        %393 = vmatpush1.msra.mxu0 0.0
        %394 = vmatprep.subr.mxu0 0.0
        %395 = vmatpush1.msra.mxu0 0.0
        %396 = vmatprep.subr.mxu0 0.0
        %397 = vmatpush1.msra.mxu0 0.0
        %398 = vmatprep.subr.mxu0 0.0
        %399 = vmatpush1.msra.mxu0 0.0
        %400 = vmatprep.subr.mxu0 0.0
        %401 = vmatpush1.msra.mxu0 0.0
        %402 = vmatprep.subr.mxu0 0.0
        %403 = vmatpush1.msra.mxu0 0.0
        %404 = vmatprep.subr.mxu0 0.0
        %405 = vmatpush1.msra.mxu0 0.0
        %406 = vmatprep.subr.mxu0 0.0
        %407 = vmatpush1.msra.mxu0 0.0
        %408 = vmatprep.subr.mxu0 0.0
        %409 = vmatpush1.msra.mxu0 0.0
        %410 = vmatprep.subr.mxu0 0.0
        %411 = vmatpush1.msra.mxu0 0.0
        %412 = vmatprep.subr.mxu0 0.0
        %413 = vmatpush1.msra.mxu0 0.0
        %414 = vmatprep.subr.mxu0 %v386
        %415 = vmatpush1.msra.mxu0 %v383
        %416 = vmatprep.subr.mxu0 %v355
        %417 = vmatpush1.msra.mxu0 %v354
        %418 = vmatprep.subr.mxu0 %v353
        %419 = vmatpush1.msra.mxu0 %v352
        %420 = vmatprep.subr.mxu0 0.0
        %421 = vmatpush2.msra.mxu0 0.0
        %422 = vmatprep.subr.mxu0 0.0
        %423 = vmatpush2.msra.mxu0 0.0
        %424 = vmatprep.subr.mxu0 0.0
        %425 = vmatpush2.msra.mxu0 0.0
        %426 = vmatprep.subr.mxu0 0.0
        %427 = vmatpush2.msra.mxu0 0.0
        %428 = vmatprep.subr.mxu0 0.0
        %429 = vmatpush2.msra.mxu0 0.0
        %430 = vmatprep.subr.mxu0 0.0
        %431 = vmatpush2.msra.mxu0 0.0
        %432 = vmatprep.subr.mxu0 0.0
        %433 = vmatpush2.msra.mxu0 0.0
        %434 = vmatprep.subr.mxu0 0.0
        %435 = vmatpush2.msra.mxu0 0.0
        %436 = vmatprep.subr.mxu0 0.0
        %437 = vmatpush2.msra.mxu0 0.0
        %438 = vmatprep.subr.mxu0 0.0
        %439 = vmatpush2.msra.mxu0 0.0
        %440 = vmatprep.subr.mxu0 0.0
        %441 = vmatpush2.msra.mxu0 0.0
        %442 = vmatprep.subr.mxu0 0.0
        %443 = vmatpush2.msra.mxu0 0.0
        %444 = vmatprep.subr.mxu0 0.0
        %445 = vmatpush2.msra.mxu0 0.0
        %446 = vmatprep.subr.mxu0 0.0
        %447 = vmatpush2.msra.mxu0 0.0
        %448 = vmatprep.subr.mxu0 0.0
        %449 = vmatpush2.msra.mxu0 0.0
        %450 = vmatprep.subr.mxu0 0.0
        %451 = vmatpush2.msra.mxu0 0.0
        %452 = vmatprep.mubr.f32.mxu0 0.0
        %453 = vmatmul.mubr.f32.gmra.mxu0 %v376
        %v454 = vpop.f32.mrf.mxu0
        %v455 = vadd.f32 %v360, %v454
        %v456 = vpop.f32.mrf.mxu0
        %v457 = vadd.f32 %v360, %v456
        %458 = vmatprep.mubr.f32.mxu0 0.0
        %459 = vmatmul.mubr.f32.gmra.mxu0 %v378
        %v460 = vpop.f32.mrf.mxu0
        %v461 = vadd.f32 %v364, %v460
        %v462 = vpop.f32.mrf.mxu0
        %v463 = vadd.f32 %v364, %v462
        %464 = vmatprep.mubr.f32.mxu0 0.0
        %465 = vmatmul.mubr.f32.gmra.mxu0 %v380
        %v466 = vpop.f32.mrf.mxu0
        %v467 = vadd.f32 %v368, %v466
        %v468 = vpop.f32.mrf.mxu0
        %v469 = vadd.f32 %v368, %v468
        %470 = vdwg.mxu0
        %v471 = vtanh.pop %v455
        %v472 = vtanh.pop %v457
        %v473 = vtanh.pop %v461
        %v474 = vtanh.pop %v463
        %v475 = vtanh.pop %v467
        %v476 = vtanh.pop %v469
        %477 = vset.pattern.permute.xlu0 64
        %478 = vperm.xlu0 %477, %v178
        %v479 = vpop.permute.xlu0 %478
        %481 = vset.pattern.permute.xlu0 64
        %482 = vperm.xlu0 %481, %v179
        %v483 = vpop.permute.xlu0 %482
        %485 = vset.pattern.permute.xlu0 64
        %486 = vperm.xlu0 %485, %v180
        %v487 = vpop.permute.xlu0 %486
        %489 = vrot.lane.b32.xlu0 %v178, 84
        %v490 = vpop.permute.xlu0 %489
        %491 = vrot.lane.b32.xlu0 %v179, 84
        %v492 = vpop.permute.xlu0 %491
        %493 = vrot.lane.b32.xlu0 %v180, 84
        %v494 = vpop.permute.xlu0 %493
        %v495 = vsel %vm255, %v490, 0
        %v497 = vsel %vm255, %v492, 0
        %v499 = vsel %vm255, %v494, 0
        %v502 = vsel %vm262, %v475, 0
        %v505 = vsel %vm262, %v476, 0
        %507 = vmatprep.subr.mxu0 0.0
        %508 = vmatpush1.msra.mxu0 0.0
        %509 = vmatprep.subr.mxu0 0.0
        %510 = vmatpush1.msra.mxu0 0.0
        %511 = vmatprep.subr.mxu0 0.0
        %512 = vmatpush1.msra.mxu0 0.0
        %513 = vmatprep.subr.mxu0 0.0
        %514 = vmatpush1.msra.mxu0 0.0
        %515 = vmatprep.subr.mxu0 0.0
        %516 = vmatpush1.msra.mxu0 0.0
        %517 = vmatprep.subr.mxu0 0.0
        %518 = vmatpush1.msra.mxu0 0.0
        %519 = vmatprep.subr.mxu0 0.0
        %520 = vmatpush1.msra.mxu0 0.0
        %521 = vmatprep.subr.mxu0 0.0
        %522 = vmatpush1.msra.mxu0 0.0
        %523 = vmatprep.subr.mxu0 0.0
        %524 = vmatpush1.msra.mxu0 0.0
        %525 = vmatprep.subr.mxu0 0.0
        %526 = vmatpush1.msra.mxu0 0.0
        %527 = vmatprep.subr.mxu0 0.0
        %528 = vmatpush1.msra.mxu0 0.0
        %529 = vmatprep.subr.mxu0 0.0
        %530 = vmatpush1.msra.mxu0 0.0
        %531 = vmatprep.subr.mxu0 0.0
        %532 = vmatpush1.msra.mxu0 0.0
        %533 = vmatprep.subr.mxu0 %v505
        %534 = vmatpush1.msra.mxu0 %v502
        %535 = vmatprep.subr.mxu0 %v474
        %536 = vmatpush1.msra.mxu0 %v473
        %537 = vmatprep.subr.mxu0 %v472
        %538 = vmatpush1.msra.mxu0 %v471
        %539 = vmatprep.subr.mxu0 0.0
        %540 = vmatpush2.msra.mxu0 0.0
        %541 = vmatprep.subr.mxu0 0.0
        %542 = vmatpush2.msra.mxu0 0.0
        %543 = vmatprep.subr.mxu0 0.0
        %544 = vmatpush2.msra.mxu0 0.0
        %545 = vmatprep.subr.mxu0 0.0
        %546 = vmatpush2.msra.mxu0 0.0
        %547 = vmatprep.subr.mxu0 0.0
        %548 = vmatpush2.msra.mxu0 0.0
        %549 = vmatprep.subr.mxu0 0.0
        %550 = vmatpush2.msra.mxu0 0.0
        %551 = vmatprep.subr.mxu0 0.0
        %552 = vmatpush2.msra.mxu0 0.0
        %553 = vmatprep.subr.mxu0 0.0
        %554 = vmatpush2.msra.mxu0 0.0
        %555 = vmatprep.subr.mxu0 0.0
        %556 = vmatpush2.msra.mxu0 0.0
        %557 = vmatprep.subr.mxu0 0.0
        %558 = vmatpush2.msra.mxu0 0.0
        %559 = vmatprep.subr.mxu0 0.0
        %560 = vmatpush2.msra.mxu0 0.0
        %561 = vmatprep.subr.mxu0 0.0
        %562 = vmatpush2.msra.mxu0 0.0
        %563 = vmatprep.subr.mxu0 0.0
        %564 = vmatpush2.msra.mxu0 0.0
        %565 = vmatprep.subr.mxu0 0.0
        %566 = vmatpush2.msra.mxu0 0.0
        %567 = vmatprep.subr.mxu0 0.0
        %568 = vmatpush2.msra.mxu0 0.0
        %569 = vmatprep.subr.mxu0 0.0
        %570 = vmatpush2.msra.mxu0 0.0
        %571 = vmatprep.mubr.f32.mxu0 0.0
        %572 = vmatmul.mubr.f32.gmra.mxu0 %v495
        %v573 = vpop.f32.mrf.mxu0
        %v574 = vadd.f32 %v479, %v573
        %v575 = vpop.f32.mrf.mxu0
        %v576 = vadd.f32 %v479, %v575
        %577 = vmatprep.mubr.f32.mxu0 0.0
        %578 = vmatmul.mubr.f32.gmra.mxu0 %v497
        %v579 = vpop.f32.mrf.mxu0
        %v580 = vadd.f32 %v483, %v579
        %v581 = vpop.f32.mrf.mxu0
        %v582 = vadd.f32 %v483, %v581
        %583 = vmatprep.mubr.f32.mxu0 0.0
        %584 = vmatmul.mubr.f32.gmra.mxu0 %v499
        %v585 = vpop.f32.mrf.mxu0
        %v586 = vadd.f32 %v487, %v585
        %v587 = vpop.f32.mrf.mxu0
        %v588 = vadd.f32 %v487, %v587
        %589 = vdwg.mxu0
        %v590 = vtanh.pop %v574
        %v591 = vtanh.pop %v576
        %v592 = vtanh.pop %v580
        %v593 = vtanh.pop %v582
        %v594 = vtanh.pop %v586
        %v595 = vtanh.pop %v588
        %596 = vset.pattern.permute.xlu0 85
        %597 = vperm.xlu0 %596, %v178
        %v598 = vpop.permute.xlu0 %597
        %600 = vrot.lane.b32.xlu0 %v178, 63
        %v601 = vpop.permute.xlu0 %600
        %v602 = vsel %vm255, %v601, 0
        %v605 = vsel %vm262, %v594, 0
        %v608 = vsel %vm262, %v595, 0
        %610 = vmatprep.subr.mxu0 0.0
        %611 = vmatpush1.msra.mxu0 0.0
        %612 = vmatprep.subr.mxu0 0.0
        %613 = vmatpush1.msra.mxu0 0.0
        %614 = vmatprep.subr.mxu0 0.0
        %615 = vmatpush1.msra.mxu0 0.0
        %616 = vmatprep.subr.mxu0 0.0
        %617 = vmatpush1.msra.mxu0 0.0
        %618 = vmatprep.subr.mxu0 0.0
        %619 = vmatpush1.msra.mxu0 0.0
        %620 = vmatprep.subr.mxu0 0.0
        %621 = vmatpush1.msra.mxu0 0.0
        %622 = vmatprep.subr.mxu0 0.0
        %623 = vmatpush1.msra.mxu0 0.0
        %624 = vmatprep.subr.mxu0 0.0
        %625 = vmatpush1.msra.mxu0 0.0
        %626 = vmatprep.subr.mxu0 0.0
        %627 = vmatpush1.msra.mxu0 0.0
        %628 = vmatprep.subr.mxu0 0.0
        %629 = vmatpush1.msra.mxu0 0.0
        %630 = vmatprep.subr.mxu0 0.0
        %631 = vmatpush1.msra.mxu0 0.0
        %632 = vmatprep.subr.mxu0 0.0
        %633 = vmatpush1.msra.mxu0 0.0
        %634 = vmatprep.subr.mxu0 0.0
        %635 = vmatpush1.msra.mxu0 0.0
        %636 = vmatprep.subr.mxu0 %v608
        %637 = vmatpush1.msra.mxu0 %v605
        %638 = vmatprep.subr.mxu0 %v593
        %639 = vmatpush1.msra.mxu0 %v592
        %640 = vmatprep.subr.mxu0 %v591
        %641 = vmatpush1.msra.mxu0 %v590
        %642 = vmatprep.subr.mxu0 0.0
        %643 = vmatpush2.msra.mxu0 0.0
        %644 = vmatprep.subr.mxu0 0.0
        %645 = vmatpush2.msra.mxu0 0.0
        %646 = vmatprep.subr.mxu0 0.0
        %647 = vmatpush2.msra.mxu0 0.0
        %648 = vmatprep.subr.mxu0 0.0
        %649 = vmatpush2.msra.mxu0 0.0
        %650 = vmatprep.subr.mxu0 0.0
        %651 = vmatpush2.msra.mxu0 0.0
        %652 = vmatprep.subr.mxu0 0.0
        %653 = vmatpush2.msra.mxu0 0.0
        %654 = vmatprep.subr.mxu0 0.0
        %655 = vmatpush2.msra.mxu0 0.0
        %656 = vmatprep.subr.mxu0 0.0
        %657 = vmatpush2.msra.mxu0 0.0
        %658 = vmatprep.subr.mxu0 0.0
        %659 = vmatpush2.msra.mxu0 0.0
        %660 = vmatprep.subr.mxu0 0.0
        %661 = vmatpush2.msra.mxu0 0.0
        %662 = vmatprep.subr.mxu0 0.0
        %663 = vmatpush2.msra.mxu0 0.0
        %664 = vmatprep.subr.mxu0 0.0
        %665 = vmatpush2.msra.mxu0 0.0
        %666 = vmatprep.subr.mxu0 0.0
        %667 = vmatpush2.msra.mxu0 0.0
        %668 = vmatprep.subr.mxu0 0.0
        %669 = vmatpush2.msra.mxu0 0.0
        %670 = vmatprep.subr.mxu0 0.0
        %671 = vmatpush2.msra.mxu0 0.0
        %672 = vmatprep.subr.mxu0 0.0
        %673 = vmatpush2.msra.mxu0 0.0
        %674 = vmatprep.mubr.f32.mxu0 0.0
        %675 = vmatmul.mubr.f32.gmra.mxu0 %v602
        %v676 = vpop.f32.mrf.mxu0
        %v677 = vadd.f32 %v598, %v676
        %v678 = vpop.f32.mrf.mxu0
        %v679 = vadd.f32 %v598, %v678
        %680 = vdwg.mxu0
        %v681 = vmul.f32 %v677, 0.5
        %v682 = vmul.f32 %v679, 0.5
        %v683 = vtanh.pop %v681
        %v684 = vtanh.pop %v682
        %v685 = vadd.f32 %v683, 1.0
        %v686 = vadd.f32 %v684, 1.0
        %v687 = vmul.f32 %v685, 0.5
        %v688 = vmul.f32 %v686, 0.5
        %689 = vst [vmem:[%s174] sm:$0x1f] %v687
        %690 = vst [vmem:[%s174 + $0x8] sm:$0x1f] %v688
        %s691 = sand.u32 %s75, 1
        %s692 = scalar_lea.sflag [#allocation4], %s691
        %s693 = sand.u32 %s75, 1
        %s694 = smul.addr %s693, 16
        %s695 = scalar_lea.vmem [#allocation7], %s694
        // Predicated region
        $region37: #{tpu_custom_call.1} parent=27 // pred_check
          %p696 = pneg %p85
        $region38: #{tpu_custom_call.1} parent=27 // pred_check_branch
          %698 = sbr.rel (%p696) target = $region40
        $region39: #{tpu_custom_call.1} parent=27 // pred_region
          %s699 = smul.u32 2, %s20
          %s701 = ssub.s32 256, 256
          %702 = vsyncadd %s692, %s701
          %s703 = smul.addr %s699, 128
          %s704 = scalar_lea.hbm %s2, %s703
          %s706 = sshll.u32 %s695, 4
          %s707 = int_to_ptr.vmem [resolvable:$true] %s706
          %709 = dma.vmem_to_hbm [thread:$0]  %s707, 256, %s704, %s692
        $region40: #{tpu_custom_call.1} parent=27 // pred_fallthru
          _
      $region28: #{tpu_custom_call.1} parent=5 // pred_fallthru
        _
      %p710 = scmp.le.s32.totalorder 2, %s15
      // Predicated region
      $region41: #{tpu_custom_call.1} parent=5 // pred_check
        %p711 = pneg %p710
      $region42: #{tpu_custom_call.1} parent=5 // pred_check_branch
        %713 = sbr.rel (%p711) target = $region44
      $region43: #{tpu_custom_call.1} parent=5 // pred_region
        %s714 = ssub.s32 %s15, 2
        // Predicated region
        $region45: #{tpu_custom_call.1} parent=43 // pred_check
          %p715 = pneg %p91
        $region46: #{tpu_custom_call.1} parent=43 // pred_check_branch
          %717 = sbr.rel (%p715) target = $region48
        $region47: #{tpu_custom_call.1} parent=43 // pred_region
          %s718 = sand.u32 %s76, 1
          %s719 = scalar_lea.sflag [#allocation4], %s718
          %s720 = sand.u32 %s76, 1
          %s721 = smul.addr %s720, 16
          %s722 = scalar_lea.vmem [#allocation7], %s721
          %723 = dma.done %s719, 256
        $region48: #{tpu_custom_call.1} parent=43 // pred_fallthru
          _
      $region44: #{tpu_custom_call.1} parent=5 // pred_fallthru
        _
    $region6: #{tpu_custom_call.1} parent=1 // loop_footer
      %s19 = sadd.s32 1, %s15
    $region7: #{tpu_custom_call.1} parent=1 // loop_footer_branch
      %14 = sbr.rel target = $region3
    $region8: #{tpu_custom_call.1} parent=1 // loop_exit
      _
    %724 = vsyncpa [#allocation3], 1
    %s725 = scalar_lea.sflag [#allocation3], 1
    %726 = vsyncpa %s725, 1
    %727 = vsyncpa [#allocation6], 1
    %728 = vsyncpa [#allocation4], 1
    %s729 = scalar_lea.sflag [#allocation4], 1
    %730 = vsyncpa %s729, 1

</llo_original>
